<compile_context>
chip_gen: v6e
topology: v6e:2x2x1
jax: 0.10.0
libtpu: 0.0.40
codegen_flags: <defaults>
</compile_context>

<pallas_src>
import jax
import jax.numpy as jnp
from jax import lax
from jax.experimental import pallas as pl
from jax.experimental.pallas import tpu as pltpu


def _round_up(x, m):
    return -(-x // m) * m


def _default_act_dtype():
    """bf16 activations only on chips with bf16 VPU/EUP paths (v6e and newer)."""
    try:
        kind = jax.devices()[0].device_kind.lower()
    except Exception:
        return jnp.float32
    if any(v in kind for v in ("v2", "v3", "v4", "v5")):
        return jnp.float32
    return jnp.bfloat16


def _make_kernel(n_shared, shared_widths, head1_width, compute_dtype, act_dtype):
    """Fused MLP kernel: shared trunk + fused, transposed two-head output.

    Ref layout: x, w_0..w_{n_shared-1}, head_w1, head_w2T, bias_pack, head_b2, out.
    Output block is (2, tb): row 0 = frustration, row 1 = cognitive load,
    batch on the lane axis (lane-dense stores).
    """

    def kernel(*refs):
        x_ref = refs[0]
        w_refs = refs[1:1 + n_shared]
        hw1_ref = refs[1 + n_shared]
        w2t_ref = refs[2 + n_shared]       # (8, 2*half) bf16, rows 0..1 live
        b_ref = refs[3 + n_shared]         # (n_shared + 1, max_width) f32
        b2_ref = refs[4 + n_shared]        # (2, 1) f32
        out_ref = refs[5 + n_shared]       # (2, tb) f32

        h = x_ref[...]

        # Shared trunk: Linear -> Tanh -> Dropout (identity at inference).
        for l in range(n_shared):
            w = shared_widths[l]
            b = b_ref[l:l + 1, 0:w].astype(act_dtype)        # (1, w)
            acc = jnp.dot(h.astype(compute_dtype), w_refs[l][...],
                          preferred_element_type=jnp.float32)
            h = jnp.tanh(acc.astype(act_dtype) + b)
            # TODO(synk): Dropout(0.1) is a no-op in eval mode; no RNG masking.

        # Fused heads, layer 1: h @ [fw1 | cw1] -> (tb, 2*half).
        b1 = b_ref[n_shared:n_shared + 1, 0:head1_width].astype(act_dtype)
        acc = jnp.dot(h.astype(compute_dtype), hw1_ref[...],
                      preferred_element_type=jnp.float32)
        g = jnp.tanh(acc.astype(act_dtype) + b1)

        # Fused heads, layer 2, transposed: contract W2T with g along the lane
        # axis -> (8, tb); rows 0..1 are the two targets with batch on lanes
        # (dense stores).  Rows 2..7 are zero padding for sublane alignment.
        out8 = lax.dot_general(
            w2t_ref[...], g.astype(compute_dtype),
            dimension_numbers=(((1,), (1,)), ((), ())),
            preferred_element_type=jnp.float32)
        out_t = out8[0:2, :] + b2_ref[...]                    # (2, tb) f32

        # torch.where(isfinite(out), out, 0)
        out_ref[...] = jnp.where(
            jnp.isfinite(out_t), out_t, jnp.zeros_like(out_t)
        ).astype(out_ref.dtype)

    return kernel


def multi_target_neural_rde_forward(logsig, params, *,
                                    compute_dtype=jnp.bfloat16,
                                    act_dtype=None,
                                    block_batch=2048):
    """Run the fused Pallas kernel.

    Args:
      logsig: (batch, input_channels) float32 (bf16 also accepted as-is).
      params: dict with keys:
        'shared': list of (W, b) tuples, W: (in, out), b: (out,)
        'frustration': [(W1, b1), (W2, b2)]
        'cognitive': [(W1, b1), (W2, b2)]
    Returns:
      (batch, 2) float32: [:, 0] frustration, [:, 1] cognitive load.
    """
    batch, in_dim = logsig.shape
    n_shared = len(params["shared"])
    shared_widths = tuple(int(w.shape[1]) for (w, _) in params["shared"])
    if act_dtype is None:
        act_dtype = _default_act_dtype()

    (fw1, fb1), (fw2, fb2) = params["frustration"]
    (cw1, cb1), (cw2, cb2) = params["cognitive"]
    half = int(fw1.shape[1])
    head1_width = 2 * half

    # --- Head layer 1 fused: [fw1 | cw1] (done once in the wrapper). ---
    hw1 = jnp.concatenate([fw1, cw1], axis=1)                  # (hidden, 2*half)
    hb1 = jnp.concatenate([fb1, cb1], axis=0)                  # (2*half,)

    # --- Head layer 2, transposed and sublane-padded to 8 rows:
    #     row 0 = [fw2^T | 0], row 1 = [0 | cw2^T], rows 2..7 = 0. ---
    w2t = jnp.zeros((8, head1_width), jnp.float32)
    w2t = w2t.at[0, :half].set(fw2[:, 0])
    w2t = w2t.at[1, half:].set(cw2[:, 0])
    hb2 = jnp.stack([fb2, cb2]).astype(jnp.float32)            # (2, 1)

    # --- Pack trunk + head-1 biases into one padded (L, max_width) f32 operand. ---
    all_biases = [b for (_, b) in params["shared"]] + [hb1]
    max_w = max(int(b.shape[0]) for b in all_biases)
    b_packed = jnp.stack(
        [jnp.pad(b.astype(jnp.float32), (0, max_w - b.shape[0]))
         for b in all_biases])                                 # (n_shared+1, max_w)

    # Weights are bf16 dot operands (f32 MXU accumulation in-kernel).
    w_args = [w.astype(compute_dtype) for (w, _) in params["shared"]]
    w_args += [hw1.astype(compute_dtype), w2t.astype(compute_dtype)]

    # --- Batch grid: large tiles (amortize ~0.35 us per-step overhead), but at
    #     least two steps for medium batches so v7x shards both TensorCores. ---
    grid_n = max(1, -(-batch // block_batch))
    if batch >= 256 and grid_n < 2:
        grid_n = 2
    tb = _round_up(-(-batch // grid_n), 128)    # lane-dense output + bf16 rows
    padded_b = tb * grid_n

    x = logsig
    if padded_b != batch:
        x = jnp.pad(x, ((0, padded_b - batch), (0, 0)))
    grid = (grid_n,)

    in_specs = [pl.BlockSpec((tb, in_dim), lambda i: (i, 0))]
    # Weights / biases are grid-invariant (index_map -> (0, 0)), i.e. VMEM
    # resident across steps.  (pipeline_mode=pl.Buffered(1) on these tiny
    # operands is an optional sweep item; not applied here.)
    in_specs += [pl.BlockSpec(w.shape, lambda i: (0, 0)) for w in w_args]
    in_specs += [pl.BlockSpec(b_packed.shape, lambda i: (0, 0)),
                 pl.BlockSpec(hb2.shape, lambda i: (0, 0))]
    out_specs = pl.BlockSpec((2, tb), lambda i: (0, i))

    # Rough per-step VMEM need -> explicit scoped-VMEM limit so block_batch can
    # be swept upward without hitting the default silently (cap < v7x physical).
    bytes_per_step = (
        2 * tb * in_dim * x.dtype.itemsize
        + sum(w.size * w.dtype.itemsize for w in w_args)
        + b_packed.size * 4 + hb2.size * 4
        + 2 * 2 * tb * 4
        + 8 * tb * max(max_w, head1_width) * 4)
    vmem_limit = int(min(48 * 1024 * 1024,
                         max(32 * 1024 * 1024, 2 * bytes_per_step)))

    # --- Advisory cost estimate for the XLA scheduler. ---
    dims = [in_dim] + list(shared_widths) + [head1_width]
    flops = 2 * padded_b * (sum(a * b for a, b in zip(dims[:-1], dims[1:]))
                            + head1_width * 2)
    transcendentals = padded_b * (sum(shared_widths) + head1_width)
    bytes_accessed = int(
        x.size * x.dtype.itemsize
        + sum(w.size * w.dtype.itemsize for w in w_args)
        + b_packed.size * 4 + hb2.size * 4
        + 2 * padded_b * 4)

    kernel = _make_kernel(n_shared, shared_widths, head1_width,
                          compute_dtype, act_dtype)

    out_t = pl.pallas_call(
        kernel,
        out_shape=jax.ShapeDtypeStruct((2, padded_b), jnp.float32),
        grid=grid,
        in_specs=in_specs,
        out_specs=out_specs,
        compiler_params=pltpu.CompilerParams(
            dimension_semantics=("parallel",),
            vmem_limit_bytes=vmem_limit),
        cost_estimate=pl.CostEstimate(
            flops=flops,
            transcendentals=transcendentals,
            bytes_accessed=bytes_accessed),
    )(x, *w_args, b_packed, hb2)

    # (2, padded_b) -> (batch, 2); [:, 0] frustration, [:, 1] cognitive load.
    return out_t[:, :batch].T


def init_params(key, input_channels, hidden_dims):
    """Deterministic parameter init (uniform, matching torch.nn.Linear shapes)."""
    params = {"shared": [], "frustration": [], "cognitive": []}

    def linear(key, fan_in, fan_out):
        k1, k2 = jax.random.split(key)
        bound = 1.0 / jnp.sqrt(fan_in)
        w = jax.random.uniform(
            k1, (fan_in, fan_out), jnp.float32, minval=-bound, maxval=bound)
        b = jax.random.uniform(
            k2, (fan_out,), jnp.float32, minval=-bound, maxval=bound)
        return w, b

    in_dim = input_channels
    for h_dim in hidden_dims:
        key, sub = jax.random.split(key)
        params["shared"].append(linear(sub, in_dim, h_dim))
        in_dim = h_dim

    half = in_dim // 2
    for head in ("frustration", "cognitive"):
        key, k1, k2 = jax.random.split(key, 3)
        params[head].append(linear(k1, in_dim, half))
        params[head].append(linear(k2, half, 1))

    return params


def reference_forward(logsig, params):
    """Pure-JAX f32 reference matching the PyTorch forward (eval mode)."""
    h = logsig
    for (w, b) in params["shared"]:
        h = jnp.tanh(h @ w + b)
    (fw1, fb1), (fw2, fb2) = params["frustration"]
    (cw1, cb1), (cw2, cb2) = params["cognitive"]
    f = jnp.tanh(h @ fw1 + fb1) @ fw2 + fb2
    c = jnp.tanh(h @ cw1 + cb1) @ cw2 + cb2
    out = jnp.concatenate([f, c], axis=1)
    return jnp.where(jnp.isfinite(out), out, jnp.zeros_like(out))


if __name__ == "__main__":
    key = jax.random.PRNGKey(0)
    key, pkey, x1key, x2key = jax.random.split(key, 4)

    input_channels = 32
    hidden_dims = [64, 32]
    params = init_params(pkey, input_channels, hidden_dims)

    # Small batch (single grid step, padded to one 128-row tile).
    logsig_small = jax.random.normal(x1key, (8, input_channels), jnp.float32)
    out_small = jax.block_until_ready(
        multi_target_neural_rde_forward(logsig_small, params))
    ref_small = reference_forward(logsig_small, params)
    assert out_small.shape == (8, 2), out_small.shape
    # bf16 weights/activations with f32 accumulation: loose tolerance vs f32 ref
    # (expected ~1e-2-scale deviation; documented for downstream users).
    assert jnp.allclose(out_small, ref_small, atol=1e-1, rtol=1e-1), (
        out_small, ref_small)

    # Medium batch (exercises batch padding and the >=2-step parallel grid).
    logsig_med = jax.random.normal(x2key, (300, input_channels), jnp.float32)
    out_med = jax.block_until_ready(
        multi_target_neural_rde_forward(logsig_med, params))
    ref_med = reference_forward(logsig_med, params)
    assert out_med.shape == (300, 2), out_med.shape
    assert jnp.allclose(out_med, ref_med, atol=1e-1, rtol=1e-1), (
        out_med, ref_med)

    print("KERNEL_OK")
</pallas_src>

<mosaic_0001>
module attributes {stable_mosaic.version = 11 : i64} {
  func.func @kernel(%arg0: i32, %arg1: memref<128x32xf32, #tpu.memory_space<vmem>>, %arg2: memref<32x64xbf16, #tpu.memory_space<vmem>>, %arg3: memref<64x32xbf16, #tpu.memory_space<vmem>>, %arg4: memref<32x32xbf16, #tpu.memory_space<vmem>>, %arg5: memref<8x32xbf16, #tpu.memory_space<vmem>>, %arg6: memref<3x64xf32, #tpu.memory_space<vmem>>, %arg7: memref<2x1xf32, #tpu.memory_space<vmem>>, %arg8: memref<2x128xf32, #tpu.memory_space<vmem>>) attributes {dimension_semantics = [#tpu.dimension_semantics<parallel>], iteration_bounds = array<i64: 1>, scalar_prefetch = 0 : i64, scratch_operands = 0 : i64, tpu.core_type = #tpu.core_type<tc>, window_params = [{transform_indices = @transform_0, window_bounds = array<i64: 128, 32>}, {pipeline_mode = #tpu.pipeline_mode<synchronous>, transform_indices = @transform_1, window_bounds = array<i64: 32, 64>}, {pipeline_mode = #tpu.pipeline_mode<synchronous>, transform_indices = @transform_2, window_bounds = array<i64: 64, 32>}, {pipeline_mode = #tpu.pipeline_mode<synchronous>, transform_indices = @transform_3, window_bounds = array<i64: 32, 32>}, {pipeline_mode = #tpu.pipeline_mode<synchronous>, transform_indices = @transform_4, window_bounds = array<i64: 8, 32>}, {pipeline_mode = #tpu.pipeline_mode<synchronous>, transform_indices = @transform_5, window_bounds = array<i64: 3, 64>}, {pipeline_mode = #tpu.pipeline_mode<synchronous>, transform_indices = @transform_6, window_bounds = array<i64: 2, 1>}, {transform_indices = @transform_7, window_bounds = array<i64: 2, 128>}]} {
    %c0 = arith.constant 0 : index
    %c0_0 = arith.constant 0 : index
    %0 = vector.load %arg1[%c0, %c0_0] : memref<128x32xf32, #tpu.memory_space<vmem>>, vector<128x32xf32>
    %c0_1 = arith.constant 0 : index
    %c0_2 = arith.constant 0 : index
    %1 = vector.load %arg6[%c0_1, %c0_2] : memref<3x64xf32, #tpu.memory_space<vmem>>, vector<1x64xf32>
    %2 = arith.truncf %1 : vector<1x64xf32> to vector<1x64xbf16>
    %3 = arith.truncf %0 : vector<128x32xf32> to vector<128x32xbf16>
    %c0_3 = arith.constant 0 : index
    %c0_4 = arith.constant 0 : index
    %4 = vector.load %arg2[%c0_3, %c0_4] : memref<32x64xbf16, #tpu.memory_space<vmem>>, vector<32x64xbf16>
    %cst = arith.constant dense<0.000000e+00> : vector<128x64xf32>
    %5 = tpu.matmul %3, %4, %cst {dimension_numbers = #tpu.dot_dimension_numbers<[1], [0], [0], [1], [0, 0, 1, 1], [], []>} : vector<128x32xbf16>, vector<32x64xbf16>, vector<128x64xf32> -> vector<128x64xf32>
    %6 = arith.truncf %5 : vector<128x64xf32> to vector<128x64xbf16>
    %7 = vector.broadcast %2 : vector<1x64xbf16> to vector<128x64xbf16>
    %8 = arith.addf %6, %7 : vector<128x64xbf16>
    %9 = math.tanh %8 : vector<128x64xbf16>
    %c1 = arith.constant 1 : index
    %c0_5 = arith.constant 0 : index
    %10 = vector.load %arg6[%c1, %c0_5] : memref<3x64xf32, #tpu.memory_space<vmem>>, vector<1x32xf32>
    %11 = arith.truncf %10 : vector<1x32xf32> to vector<1x32xbf16>
    %c0_6 = arith.constant 0 : index
    %c0_7 = arith.constant 0 : index
    %12 = vector.load %arg3[%c0_6, %c0_7] : memref<64x32xbf16, #tpu.memory_space<vmem>>, vector<64x32xbf16>
    %cst_8 = arith.constant dense<0.000000e+00> : vector<128x32xf32>
    %13 = tpu.matmul %9, %12, %cst_8 {dimension_numbers = #tpu.dot_dimension_numbers<[1], [0], [0], [1], [0, 0, 1, 1], [], []>} : vector<128x64xbf16>, vector<64x32xbf16>, vector<128x32xf32> -> vector<128x32xf32>
    %14 = arith.truncf %13 : vector<128x32xf32> to vector<128x32xbf16>
    %15 = vector.broadcast %11 : vector<1x32xbf16> to vector<128x32xbf16>
    %16 = arith.addf %14, %15 : vector<128x32xbf16>
    %17 = math.tanh %16 : vector<128x32xbf16>
    %c2 = arith.constant 2 : index
    %c0_9 = arith.constant 0 : index
    %18 = vector.load %arg6[%c2, %c0_9] : memref<3x64xf32, #tpu.memory_space<vmem>>, vector<1x32xf32>
    %19 = arith.truncf %18 : vector<1x32xf32> to vector<1x32xbf16>
    %c0_10 = arith.constant 0 : index
    %c0_11 = arith.constant 0 : index
    %20 = vector.load %arg4[%c0_10, %c0_11] : memref<32x32xbf16, #tpu.memory_space<vmem>>, vector<32x32xbf16>
    %cst_12 = arith.constant dense<0.000000e+00> : vector<128x32xf32>
    %21 = tpu.matmul %17, %20, %cst_12 {dimension_numbers = #tpu.dot_dimension_numbers<[1], [0], [0], [1], [0, 0, 1, 1], [], []>} : vector<128x32xbf16>, vector<32x32xbf16>, vector<128x32xf32> -> vector<128x32xf32>
    %22 = arith.truncf %21 : vector<128x32xf32> to vector<128x32xbf16>
    %23 = vector.broadcast %19 : vector<1x32xbf16> to vector<128x32xbf16>
    %24 = arith.addf %22, %23 : vector<128x32xbf16>
    %25 = math.tanh %24 : vector<128x32xbf16>
    %c0_13 = arith.constant 0 : index
    %c0_14 = arith.constant 0 : index
    %26 = vector.load %arg5[%c0_13, %c0_14] : memref<8x32xbf16, #tpu.memory_space<vmem>>, vector<8x32xbf16>
    %cst_15 = arith.constant dense<0.000000e+00> : vector<8x128xf32>
    %27 = tpu.matmul %26, %25, %cst_15 {dimension_numbers = #tpu.dot_dimension_numbers<[1], [1], [0], [0], [0, 0, 1, 0], [], []>} : vector<8x32xbf16>, vector<128x32xbf16>, vector<8x128xf32> -> vector<8x128xf32>
    %28 = vector.extract_strided_slice %27 {offsets = [0, 0], sizes = [2, 128], strides = [1, 1]} : vector<8x128xf32> to vector<2x128xf32>
    %c0_16 = arith.constant 0 : index
    %c0_17 = arith.constant 0 : index
    %29 = vector.load %arg7[%c0_16, %c0_17] : memref<2x1xf32, #tpu.memory_space<vmem>>, vector<2x1xf32>
    %30 = vector.broadcast %29 : vector<2x1xf32> to vector<2x128xf32>
    %31 = arith.addf %28, %30 : vector<2x128xf32>
    %32 = tpu.weird %31 : vector<2x128xf32> -> vector<2x128xi1>
    %cst_18 = arith.constant dense<true> : vector<2x128xi1>
    %33 = arith.xori %32, %cst_18 : vector<2x128xi1>
    %cst_19 = arith.constant 0.000000e+00 : f32
    %34 = vector.broadcast %cst_19 : f32 to vector<2x128xf32>
    %35 = arith.select %33, %31, %34 : vector<2x128xi1>, vector<2x128xf32>
    %c0_20 = arith.constant 0 : index
    %c0_21 = arith.constant 0 : index
    %36 = vector.load %arg8[%c0_20, %c0_21] : memref<2x128xf32, #tpu.memory_space<vmem>>, vector<2x128xf32>
    tpu.vector_store %arg8[%c0_20, %c0_21], %35 {strides = array<i32>} : memref<2x128xf32, #tpu.memory_space<vmem>>, vector<2x128xf32>,
    return
  }
  func.func @transform_0(%arg0: i32) -> (i32, i32) {
    %c0_i32 = arith.constant 0 : i32
    %c0_i32_0 = arith.constant 0 : i32
    return %arg0, %c0_i32 : i32, i32
  }
  func.func @transform_1(%arg0: i32) -> (i32, i32) {
    %c0_i32 = arith.constant 0 : i32
    %c0_i32_0 = arith.constant 0 : i32
    %c0_i32_1 = arith.constant 0 : i32
    return %c0_i32, %c0_i32_0 : i32, i32
  }
  func.func @transform_2(%arg0: i32) -> (i32, i32) {
    %c0_i32 = arith.constant 0 : i32
    %c0_i32_0 = arith.constant 0 : i32
    %c0_i32_1 = arith.constant 0 : i32
    return %c0_i32, %c0_i32_0 : i32, i32
  }
  func.func @transform_3(%arg0: i32) -> (i32, i32) {
    %c0_i32 = arith.constant 0 : i32
    %c0_i32_0 = arith.constant 0 : i32
    %c0_i32_1 = arith.constant 0 : i32
    return %c0_i32, %c0_i32_0 : i32, i32
  }
  func.func @transform_4(%arg0: i32) -> (i32, i32) {
    %c0_i32 = arith.constant 0 : i32
    %c0_i32_0 = arith.constant 0 : i32
    %c0_i32_1 = arith.constant 0 : i32
    return %c0_i32, %c0_i32_0 : i32, i32
  }
  func.func @transform_5(%arg0: i32) -> (i32, i32) {
    %c0_i32 = arith.constant 0 : i32
    %c0_i32_0 = arith.constant 0 : i32
    %c0_i32_1 = arith.constant 0 : i32
    return %c0_i32, %c0_i32_0 : i32, i32
  }
  func.func @transform_6(%arg0: i32) -> (i32, i32) {
    %c0_i32 = arith.constant 0 : i32
    %c0_i32_0 = arith.constant 0 : i32
    %c0_i32_1 = arith.constant 0 : i32
    return %c0_i32, %c0_i32_0 : i32, i32
  }
  func.func @transform_7(%arg0: i32) -> (i32, i32) {
    %c0_i32 = arith.constant 0 : i32
    %c0_i32_0 = arith.constant 0 : i32
    return %c0_i32, %arg0 : i32, i32
  }
}

</mosaic_0001>

<llo_original>
// kernel: tpu_custom_call.1
$region0: #{tpu_custom_call.1}
  #allocation0 [shape = 'u32[]', space=smem, size = 0x4, offset = 0x4, fixed_abs, tag = 'smem constant byte address 0x4 - core index']
  #allocation1 [shape = 'u32[144,128]{1,0:T(1,128)}', space=vmem, size = 0x12000, scoped, tag = 'internal scratch']
  %s0 = inlined_call_operand.vmem [shape: f32[128,32], index: 0, kind: input, shape index: {}]
  %s1 = inlined_call_operand.vmem [shape: bf16[32,64], index: 1, kind: input, shape index: {}]
  %s2 = inlined_call_operand.vmem [shape: bf16[64,32], index: 2, kind: input, shape index: {}]
  %s3 = inlined_call_operand.vmem [shape: bf16[32,32], index: 3, kind: input, shape index: {}]
  %s4 = inlined_call_operand.vmem [shape: bf16[8,32], index: 4, kind: input, shape index: {}]
  %s5 = inlined_call_operand.vmem [shape: f32[3,64], index: 5, kind: input, shape index: {}]
  %s6 = inlined_call_operand.vmem [shape: f32[2,1], index: 6, kind: input, shape index: {}]
  %s7 = inlined_call_operand.hbm [shape: f32[2,128], index: 7, kind: output, shape index: {}]
  %s8 = sld [smem:[#allocation0]]
  $region38: #{tpu_custom_call.1} parent=0
    _
  %s10 = ssub.s32 1, %s8
  %s11 = scalar_select 0, %s10, %s8
  $region1: #{tpu_custom_call.1} parent=0
    #allocation2 [shape = 'u8[1024]{0}', space=vmem, size = 0x400, scoped, tag = 'output window, operand 0, single buffered']
    #allocation3 [shape = 's32[1]{0}', space=sflag, size = 0x4, scoped, tag = 'scoped memory for tpu_custom_call.1']
    %12 = vsyncpa [#allocation3], 0
    // Predicated region
    $region2: #{tpu_custom_call.1} parent=1 // pred_check
      _
    $region3: #{tpu_custom_call.1} parent=1 // pred_check_branch
      %14 = sbr.rel (0) target = $region5
    $region4: #{tpu_custom_call.1} parent=1 // pred_region
      _
    $region5: #{tpu_custom_call.1} parent=1 // pred_fallthru
      _
    // Predicated region
    $region6: #{tpu_custom_call.1} parent=1 // pred_check
      _
    $region7: #{tpu_custom_call.1} parent=1 // pred_check_branch
      %16 = sbr.rel (0) target = $region9
    $region8: #{tpu_custom_call.1} parent=1 // pred_region
      _
    $region9: #{tpu_custom_call.1} parent=1 // pred_fallthru
      _
    // Predicated region
    $region10: #{tpu_custom_call.1} parent=1 // pred_check
      _
    $region11: #{tpu_custom_call.1} parent=1 // pred_check_branch
      %18 = sbr.rel (0) target = $region13
    $region12: #{tpu_custom_call.1} parent=1 // pred_region
      _
    $region13: #{tpu_custom_call.1} parent=1 // pred_fallthru
      _
    // Predicated region
    $region14: #{tpu_custom_call.1} parent=1 // pred_check
      _
    $region15: #{tpu_custom_call.1} parent=1 // pred_check_branch
      %20 = sbr.rel (0) target = $region17
    $region16: #{tpu_custom_call.1} parent=1 // pred_region
      _
    $region17: #{tpu_custom_call.1} parent=1 // pred_fallthru
      _
    // Predicated region
    $region18: #{tpu_custom_call.1} parent=1 // pred_check
      _
    $region19: #{tpu_custom_call.1} parent=1 // pred_check_branch
      %22 = sbr.rel (0) target = $region21
    $region20: #{tpu_custom_call.1} parent=1 // pred_region
      _
    $region21: #{tpu_custom_call.1} parent=1 // pred_fallthru
      _
    // Predicated region
    $region22: #{tpu_custom_call.1} parent=1 // pred_check
      _
    $region23: #{tpu_custom_call.1} parent=1 // pred_check_branch
      %24 = sbr.rel (0) target = $region25
    $region24: #{tpu_custom_call.1} parent=1 // pred_region
      _
    $region25: #{tpu_custom_call.1} parent=1 // pred_fallthru
      _
    // Predicated region
    $region26: #{tpu_custom_call.1} parent=1 // pred_check
      _
    $region27: #{tpu_custom_call.1} parent=1 // pred_check_branch
      %26 = sbr.rel (0) target = $region29
    $region28: #{tpu_custom_call.1} parent=1 // pred_region
      _
    $region29: #{tpu_custom_call.1} parent=1 // pred_fallthru
      _
    %v28 = vld [vmem:[%s0] sm:$0xff]
    %v29 = vld [vmem:[%s0 + $0x8] sm:$0xff]
    %v30 = vld [vmem:[%s0 + $0x10] sm:$0xff]
    %v31 = vld [vmem:[%s0 + $0x18] sm:$0xff]
    %v32 = vld [vmem:[%s0 + $0x20] sm:$0xff]
    %v33 = vld [vmem:[%s0 + $0x28] sm:$0xff]
    %v34 = vld [vmem:[%s0 + $0x30] sm:$0xff]
    %v35 = vld [vmem:[%s0 + $0x38] sm:$0xff]
    %v36 = vld [vmem:[%s0 + $0x40] sm:$0xff]
    %v37 = vld [vmem:[%s0 + $0x48] sm:$0xff]
    %v38 = vld [vmem:[%s0 + $0x50] sm:$0xff]
    %v39 = vld [vmem:[%s0 + $0x58] sm:$0xff]
    %v40 = vld [vmem:[%s0 + $0x60] sm:$0xff]
    %v41 = vld [vmem:[%s0 + $0x68] sm:$0xff]
    %v42 = vld [vmem:[%s0 + $0x70] sm:$0xff]
    %v43 = vld [vmem:[%s0 + $0x78] sm:$0xff]
    %v44 = vld [vmem:[%s5] sm:$0x1]
    %v45 = vpack.c.bf16 %v44, %v44
    %v46 = vpack.c.bf16 %v29, %v28
    %v47 = vpack.c.bf16 %v31, %v30
    %v48 = vpack.c.bf16 %v33, %v32
    %v49 = vpack.c.bf16 %v35, %v34
    %v50 = vpack.c.bf16 %v37, %v36
    %v51 = vpack.c.bf16 %v39, %v38
    %v52 = vpack.c.bf16 %v41, %v40
    %v53 = vpack.c.bf16 %v43, %v42
    %v54 = vld [vmem:[%s1] sm:$0xf]
    %v55 = vld [vmem:[%s1 + $0x4] sm:$0xf]
    %v56 = vld [vmem:[%s1 + $0x8] sm:$0xf]
    %v57 = vld [vmem:[%s1 + $0xc] sm:$0xf]
    %v62 = vunpack.c.l.b16 %v54
    %v63 = vunpack.c.l.b16 %v55
    %v64 = vunpack.c.l.b16 %v56
    %v65 = vunpack.c.l.b16 %v57
    %v66 = vpack.c.b16 %v63, %v62
    %v67 = vpack.c.b16 %v65, %v64
    %vm70 = vcmask 261120
    %v72 = vsel %vm70, %v46, 0
    %v75 = vsel %vm70, %v47, 0
    %v78 = vsel %vm70, %v48, 0
    %v81 = vsel %vm70, %v49, 0
    %v84 = vsel %vm70, %v50, 0
    %v87 = vsel %vm70, %v51, 0
    %v90 = vsel %vm70, %v52, 0
    %v93 = vsel %vm70, %v53, 0
    %95 = vmatprep.subr.bf16.mxu0 0
    %96 = vmatpush1.bf16.msra.mxu0 0
    %97 = vmatprep.subr.bf16.mxu0 0
    %98 = vmatpush1.bf16.msra.mxu0 0
    %99 = vmatprep.subr.bf16.mxu0 0
    %100 = vmatpush1.bf16.msra.mxu0 0
    %101 = vmatprep.subr.bf16.mxu0 0
    %102 = vmatpush1.bf16.msra.mxu0 0
    %103 = vmatprep.subr.bf16.mxu0 0
    %104 = vmatpush1.bf16.msra.mxu0 0
    %105 = vmatprep.subr.bf16.mxu0 0
    %106 = vmatpush1.bf16.msra.mxu0 0
    %107 = vmatprep.subr.bf16.mxu0 0
    %108 = vmatpush1.bf16.msra.mxu0 %v67
    %109 = vmatprep.subr.bf16.mxu0 0
    %110 = vmatpush1.bf16.msra.mxu0 %v66
    %111 = vmatprep.subr.bf16.mxu0 0
    %112 = vmatpush2.bf16.msra.mxu0 0
    %113 = vmatprep.subr.bf16.mxu0 0
    %114 = vmatpush2.bf16.msra.mxu0 0
    %115 = vmatprep.subr.bf16.mxu0 0
    %116 = vmatpush2.bf16.msra.mxu0 0
    %117 = vmatprep.subr.bf16.mxu0 0
    %118 = vmatpush2.bf16.msra.mxu0 0
    %119 = vmatprep.subr.bf16.mxu0 0
    %120 = vmatpush2.bf16.msra.mxu0 0
    %121 = vmatprep.subr.bf16.mxu0 0
    %122 = vmatpush2.bf16.msra.mxu0 0
    %123 = vmatprep.subr.bf16.mxu0 0
    %124 = vmatpush2.bf16.msra.mxu0 0
    %125 = vmatprep.subr.bf16.mxu0 0
    %126 = vmatpush2.bf16.msra.mxu0 0
    %127 = vmatprep.mubr.bf16.mxu0 0
    %128 = vmatmul.mubr.bf16.gmra.mxu0 %v72
    %v129 = vpop.f32.mrf.mxu0
    %v130 = vadd.f32 0.0, %v129
    %v131 = vpop.f32.mrf.mxu0
    %v132 = vpop.f32.mrf.mxu0
    %v133 = vadd.f32 0.0, %v132
    %v134 = vpop.f32.mrf.mxu0
    %135 = vmatprep.mubr.bf16.mxu0 0
    %136 = vmatmul.mubr.bf16.gmra.mxu0 %v75
    %v137 = vpop.f32.mrf.mxu0
    %v138 = vadd.f32 0.0, %v137
    %v139 = vpop.f32.mrf.mxu0
    %v140 = vpop.f32.mrf.mxu0
    %v141 = vadd.f32 0.0, %v140
    %v142 = vpop.f32.mrf.mxu0
    %143 = vmatprep.mubr.bf16.mxu0 0
    %144 = vmatmul.mubr.bf16.gmra.mxu0 %v78
    %v145 = vpop.f32.mrf.mxu0
    %v146 = vadd.f32 0.0, %v145
    %v147 = vpop.f32.mrf.mxu0
    %v148 = vpop.f32.mrf.mxu0
    %v149 = vadd.f32 0.0, %v148
    %v150 = vpop.f32.mrf.mxu0
    %151 = vmatprep.mubr.bf16.mxu0 0
    %152 = vmatmul.mubr.bf16.gmra.mxu0 %v81
    %v153 = vpop.f32.mrf.mxu0
    %v154 = vadd.f32 0.0, %v153
    %v155 = vpop.f32.mrf.mxu0
    %v156 = vpop.f32.mrf.mxu0
    %v157 = vadd.f32 0.0, %v156
    %v158 = vpop.f32.mrf.mxu0
    %159 = vmatprep.mubr.bf16.mxu0 0
    %160 = vmatmul.mubr.bf16.gmra.mxu0 %v84
    %v161 = vpop.f32.mrf.mxu0
    %v162 = vadd.f32 0.0, %v161
    %v163 = vpop.f32.mrf.mxu0
    %v164 = vpop.f32.mrf.mxu0
    %v165 = vadd.f32 0.0, %v164
    %v166 = vpop.f32.mrf.mxu0
    %167 = vmatprep.mubr.bf16.mxu0 0
    %168 = vmatmul.mubr.bf16.gmra.mxu0 %v87
    %v169 = vpop.f32.mrf.mxu0
    %v170 = vadd.f32 0.0, %v169
    %v171 = vpop.f32.mrf.mxu0
    %v172 = vpop.f32.mrf.mxu0
    %v173 = vadd.f32 0.0, %v172
    %v174 = vpop.f32.mrf.mxu0
    %175 = vmatprep.mubr.bf16.mxu0 0
    %176 = vmatmul.mubr.bf16.gmra.mxu0 %v90
    %v177 = vpop.f32.mrf.mxu0
    %v178 = vadd.f32 0.0, %v177
    %v179 = vpop.f32.mrf.mxu0
    %v180 = vpop.f32.mrf.mxu0
    %v181 = vadd.f32 0.0, %v180
    %v182 = vpop.f32.mrf.mxu0
    %183 = vmatprep.mubr.bf16.mxu0 0
    %184 = vmatmul.mubr.bf16.gmra.mxu0 %v93
    %v185 = vpop.f32.mrf.mxu0
    %v186 = vadd.f32 0.0, %v185
    %v187 = vpop.f32.mrf.mxu0
    %v188 = vpop.f32.mrf.mxu0
    %v189 = vadd.f32 0.0, %v188
    %v190 = vpop.f32.mrf.mxu0
    %191 = vdwg.mxu0
    %v192 = vpack.c.bf16 %v133, %v130
    %v193 = vpack.c.bf16 %v141, %v138
    %v194 = vpack.c.bf16 %v149, %v146
    %v195 = vpack.c.bf16 %v157, %v154
    %v196 = vpack.c.bf16 %v165, %v162
    %v197 = vpack.c.bf16 %v173, %v170
    %v198 = vpack.c.bf16 %v181, %v178
    %v199 = vpack.c.bf16 %v189, %v186
    %v201 = vpack.i.b16 %v45, %v45
    %v203 = vlaneseq
    %v204 = vshrl.u32 %v203, 7
    %v205 = vsub.s32 0, %v204
    %v206 = vrot.slane %v201, %v205
    %v207 = vadd.bf16 %v192, %v206
    %v208 = vadd.bf16 %v193, %v206
    %v209 = vadd.bf16 %v194, %v206
    %v210 = vadd.bf16 %v195, %v206
    %v211 = vadd.bf16 %v196, %v206
    %v212 = vadd.bf16 %v197, %v206
    %v213 = vadd.bf16 %v198, %v206
    %v214 = vadd.bf16 %v199, %v206
    %v215 = vtanh.bf16.pop %v207
    %v216 = vtanh.bf16.pop %v208
    %v217 = vtanh.bf16.pop %v209
    %v218 = vtanh.bf16.pop %v210
    %v219 = vtanh.bf16.pop %v211
    %v220 = vtanh.bf16.pop %v212
    %v221 = vtanh.bf16.pop %v213
    %v222 = vtanh.bf16.pop %v214
    %v223 = vld [vmem:[%s5 + $0x1] sm:$0x1]
    %v224 = vpack.c.bf16 %v223, %v223
    %v225 = vld [vmem:[%s2] sm:$0xf]
    %v226 = vld [vmem:[%s2 + $0x4] sm:$0xf]
    %v227 = vld [vmem:[%s2 + $0x8] sm:$0xf]
    %v228 = vld [vmem:[%s2 + $0xc] sm:$0xf]
    %v229 = vld [vmem:[%s2 + $0x10] sm:$0xf]
    %v230 = vld [vmem:[%s2 + $0x14] sm:$0xf]
    %v231 = vld [vmem:[%s2 + $0x18] sm:$0xf]
    %v232 = vld [vmem:[%s2 + $0x1c] sm:$0xf]
    %v241 = vunpack.c.l.b16 %v225
    %v242 = vunpack.c.l.b16 %v226
    %v243 = vunpack.c.l.b16 %v227
    %v244 = vunpack.c.l.b16 %v228
    %v245 = vunpack.c.l.b16 %v229
    %v246 = vunpack.c.l.b16 %v230
    %v247 = vunpack.c.l.b16 %v231
    %v248 = vunpack.c.l.b16 %v232
    %v249 = vpack.c.b16 %v242, %v241
    %v250 = vpack.c.b16 %v244, %v243
    %v251 = vpack.c.b16 %v246, %v245
    %v252 = vpack.c.b16 %v248, %v247
    %vm257 = vcmask 523264
    %v259 = vsel %vm257, %v215, 0
    %v262 = vsel %vm257, %v216, 0
    %v265 = vsel %vm257, %v217, 0
    %v268 = vsel %vm257, %v218, 0
    %v271 = vsel %vm257, %v219, 0
    %v274 = vsel %vm257, %v220, 0
    %v277 = vsel %vm257, %v221, 0
    %v280 = vsel %vm257, %v222, 0
    %282 = vmatprep.subr.bf16.mxu0 0
    %283 = vmatpush1.bf16.msra.mxu0 0
    %284 = vmatprep.subr.bf16.mxu0 0
    %285 = vmatpush1.bf16.msra.mxu0 0
    %286 = vmatprep.subr.bf16.mxu0 0
    %287 = vmatpush1.bf16.msra.mxu0 0
    %288 = vmatprep.subr.bf16.mxu0 0
    %289 = vmatpush1.bf16.msra.mxu0 0
    %290 = vmatprep.subr.bf16.mxu0 0
    %291 = vmatpush1.bf16.msra.mxu0 %v252
    %292 = vmatprep.subr.bf16.mxu0 0
    %293 = vmatpush1.bf16.msra.mxu0 %v251
    %294 = vmatprep.subr.bf16.mxu0 0
    %295 = vmatpush1.bf16.msra.mxu0 %v250
    %296 = vmatprep.subr.bf16.mxu0 0
    %297 = vmatpush1.bf16.msra.mxu0 %v249
    %298 = vmatprep.subr.bf16.mxu0 0
    %299 = vmatpush2.bf16.msra.mxu0 0
    %300 = vmatprep.subr.bf16.mxu0 0
    %301 = vmatpush2.bf16.msra.mxu0 0
    %302 = vmatprep.subr.bf16.mxu0 0
    %303 = vmatpush2.bf16.msra.mxu0 0
    %304 = vmatprep.subr.bf16.mxu0 0
    %305 = vmatpush2.bf16.msra.mxu0 0
    %306 = vmatprep.subr.bf16.mxu0 0
    %307 = vmatpush2.bf16.msra.mxu0 0
    %308 = vmatprep.subr.bf16.mxu0 0
    %309 = vmatpush2.bf16.msra.mxu0 0
    %310 = vmatprep.subr.bf16.mxu0 0
    %311 = vmatpush2.bf16.msra.mxu0 0
    %312 = vmatprep.subr.bf16.mxu0 0
    %313 = vmatpush2.bf16.msra.mxu0 0
    %314 = vmatprep.mubr.bf16.mxu0 0
    %315 = vmatmul.mubr.bf16.gmra.mxu0 %v259
    %v316 = vpop.f32.mrf.mxu0
    %v317 = vadd.f32 0.0, %v316
    %v318 = vpop.f32.mrf.mxu0
    %v319 = vpop.f32.mrf.mxu0
    %v320 = vadd.f32 0.0, %v319
    %v321 = vpop.f32.mrf.mxu0
    %322 = vmatprep.mubr.bf16.mxu0 0
    %323 = vmatmul.mubr.bf16.gmra.mxu0 %v262
    %v324 = vpop.f32.mrf.mxu0
    %v325 = vadd.f32 0.0, %v324
    %v326 = vpop.f32.mrf.mxu0
    %v327 = vpop.f32.mrf.mxu0
    %v328 = vadd.f32 0.0, %v327
    %v329 = vpop.f32.mrf.mxu0
    %330 = vmatprep.mubr.bf16.mxu0 0
    %331 = vmatmul.mubr.bf16.gmra.mxu0 %v265
    %v332 = vpop.f32.mrf.mxu0
    %v333 = vadd.f32 0.0, %v332
    %v334 = vpop.f32.mrf.mxu0
    %v335 = vpop.f32.mrf.mxu0
    %v336 = vadd.f32 0.0, %v335
    %v337 = vpop.f32.mrf.mxu0
    %338 = vmatprep.mubr.bf16.mxu0 0
    %339 = vmatmul.mubr.bf16.gmra.mxu0 %v268
    %v340 = vpop.f32.mrf.mxu0
    %v341 = vadd.f32 0.0, %v340
    %v342 = vpop.f32.mrf.mxu0
    %v343 = vpop.f32.mrf.mxu0
    %v344 = vadd.f32 0.0, %v343
    %v345 = vpop.f32.mrf.mxu0
    %346 = vmatprep.mubr.bf16.mxu0 0
    %347 = vmatmul.mubr.bf16.gmra.mxu0 %v271
    %v348 = vpop.f32.mrf.mxu0
    %v349 = vadd.f32 0.0, %v348
    %v350 = vpop.f32.mrf.mxu0
    %v351 = vpop.f32.mrf.mxu0
    %v352 = vadd.f32 0.0, %v351
    %v353 = vpop.f32.mrf.mxu0
    %354 = vmatprep.mubr.bf16.mxu0 0
    %355 = vmatmul.mubr.bf16.gmra.mxu0 %v274
    %v356 = vpop.f32.mrf.mxu0
    %v357 = vadd.f32 0.0, %v356
    %v358 = vpop.f32.mrf.mxu0
    %v359 = vpop.f32.mrf.mxu0
    %v360 = vadd.f32 0.0, %v359
    %v361 = vpop.f32.mrf.mxu0
    %362 = vmatprep.mubr.bf16.mxu0 0
    %363 = vmatmul.mubr.bf16.gmra.mxu0 %v277
    %v364 = vpop.f32.mrf.mxu0
    %v365 = vadd.f32 0.0, %v364
    %v366 = vpop.f32.mrf.mxu0
    %v367 = vpop.f32.mrf.mxu0
    %v368 = vadd.f32 0.0, %v367
    %v369 = vpop.f32.mrf.mxu0
    %370 = vmatprep.mubr.bf16.mxu0 0
    %371 = vmatmul.mubr.bf16.gmra.mxu0 %v280
    %v372 = vpop.f32.mrf.mxu0
    %v373 = vadd.f32 0.0, %v372
    %v374 = vpop.f32.mrf.mxu0
    %v375 = vpop.f32.mrf.mxu0
    %v376 = vadd.f32 0.0, %v375
    %v377 = vpop.f32.mrf.mxu0
    %378 = vdwg.mxu0
    %v379 = vpack.c.bf16 %v320, %v317
    %v380 = vpack.c.bf16 %v328, %v325
    %v381 = vpack.c.bf16 %v336, %v333
    %v382 = vpack.c.bf16 %v344, %v341
    %v383 = vpack.c.bf16 %v352, %v349
    %v384 = vpack.c.bf16 %v360, %v357
    %v385 = vpack.c.bf16 %v368, %v365
    %v386 = vpack.c.bf16 %v376, %v373
    %v388 = vpack.i.b16 %v224, %v224
    %v390 = vlaneseq
    %v391 = vshrl.u32 %v390, 7
    %v392 = vsub.s32 0, %v391
    %v393 = vrot.slane %v388, %v392
    %v394 = vadd.bf16 %v379, %v393
    %v395 = vadd.bf16 %v380, %v393
    %v396 = vadd.bf16 %v381, %v393
    %v397 = vadd.bf16 %v382, %v393
    %v398 = vadd.bf16 %v383, %v393
    %v399 = vadd.bf16 %v384, %v393
    %v400 = vadd.bf16 %v385, %v393
    %v401 = vadd.bf16 %v386, %v393
    %v402 = vtanh.bf16.pop %v394
    %v403 = vtanh.bf16.pop %v395
    %v404 = vtanh.bf16.pop %v396
    %v405 = vtanh.bf16.pop %v397
    %v406 = vtanh.bf16.pop %v398
    %v407 = vtanh.bf16.pop %v399
    %v408 = vtanh.bf16.pop %v400
    %v409 = vtanh.bf16.pop %v401
    %v410 = vld [vmem:[%s5 + $0x2] sm:$0x1]
    %v411 = vpack.c.bf16 %v410, %v410
    %v412 = vld [vmem:[%s3] sm:$0xf]
    %v413 = vld [vmem:[%s3 + $0x4] sm:$0xf]
    %v414 = vld [vmem:[%s3 + $0x8] sm:$0xf]
    %v415 = vld [vmem:[%s3 + $0xc] sm:$0xf]
    %v420 = vunpack.c.l.b16 %v412
    %v421 = vunpack.c.l.b16 %v413
    %v422 = vunpack.c.l.b16 %v414
    %v423 = vunpack.c.l.b16 %v415
    %v424 = vpack.c.b16 %v421, %v420
    %v425 = vpack.c.b16 %v423, %v422
    %v429 = vsel %vm70, %v402, 0
    %v432 = vsel %vm70, %v403, 0
    %v435 = vsel %vm70, %v404, 0
    %v438 = vsel %vm70, %v405, 0
    %v441 = vsel %vm70, %v406, 0
    %v444 = vsel %vm70, %v407, 0
    %v447 = vsel %vm70, %v408, 0
    %v450 = vsel %vm70, %v409, 0
    %452 = vmatprep.subr.bf16.mxu0 0
    %453 = vmatpush1.bf16.msra.mxu0 0
    %454 = vmatprep.subr.bf16.mxu0 0
    %455 = vmatpush1.bf16.msra.mxu0 0
    %456 = vmatprep.subr.bf16.mxu0 0
    %457 = vmatpush1.bf16.msra.mxu0 0
    %458 = vmatprep.subr.bf16.mxu0 0
    %459 = vmatpush1.bf16.msra.mxu0 0
    %460 = vmatprep.subr.bf16.mxu0 0
    %461 = vmatpush1.bf16.msra.mxu0 0
    %462 = vmatprep.subr.bf16.mxu0 0
    %463 = vmatpush1.bf16.msra.mxu0 0
    %464 = vmatprep.subr.bf16.mxu0 0
    %465 = vmatpush1.bf16.msra.mxu0 %v425
    %466 = vmatprep.subr.bf16.mxu0 0
    %467 = vmatpush1.bf16.msra.mxu0 %v424
    %468 = vmatprep.subr.bf16.mxu0 0
    %469 = vmatpush2.bf16.msra.mxu0 0
    %470 = vmatprep.subr.bf16.mxu0 0
    %471 = vmatpush2.bf16.msra.mxu0 0
    %472 = vmatprep.subr.bf16.mxu0 0
    %473 = vmatpush2.bf16.msra.mxu0 0
    %474 = vmatprep.subr.bf16.mxu0 0
    %475 = vmatpush2.bf16.msra.mxu0 0
    %476 = vmatprep.subr.bf16.mxu0 0
    %477 = vmatpush2.bf16.msra.mxu0 0
    %478 = vmatprep.subr.bf16.mxu0 0
    %479 = vmatpush2.bf16.msra.mxu0 0
    %480 = vmatprep.subr.bf16.mxu0 0
    %481 = vmatpush2.bf16.msra.mxu0 0
    %482 = vmatprep.subr.bf16.mxu0 0
    %483 = vmatpush2.bf16.msra.mxu0 0
    %484 = vmatprep.mubr.bf16.mxu0 0
    %485 = vmatmul.mubr.bf16.gmra.mxu0 %v429
    %v486 = vpop.f32.mrf.mxu0
    %v487 = vadd.f32 0.0, %v486
    %v488 = vpop.f32.mrf.mxu0
    %v489 = vpop.f32.mrf.mxu0
    %v490 = vadd.f32 0.0, %v489
    %v491 = vpop.f32.mrf.mxu0
    %492 = vmatprep.mubr.bf16.mxu0 0
    %493 = vmatmul.mubr.bf16.gmra.mxu0 %v432
    %v494 = vpop.f32.mrf.mxu0
    %v495 = vadd.f32 0.0, %v494
    %v496 = vpop.f32.mrf.mxu0
    %v497 = vpop.f32.mrf.mxu0
    %v498 = vadd.f32 0.0, %v497
    %v499 = vpop.f32.mrf.mxu0
    %500 = vmatprep.mubr.bf16.mxu0 0
    %501 = vmatmul.mubr.bf16.gmra.mxu0 %v435
    %v502 = vpop.f32.mrf.mxu0
    %v503 = vadd.f32 0.0, %v502
    %v504 = vpop.f32.mrf.mxu0
    %v505 = vpop.f32.mrf.mxu0
    %v506 = vadd.f32 0.0, %v505
    %v507 = vpop.f32.mrf.mxu0
    %508 = vmatprep.mubr.bf16.mxu0 0
    %509 = vmatmul.mubr.bf16.gmra.mxu0 %v438
    %v510 = vpop.f32.mrf.mxu0
    %v511 = vadd.f32 0.0, %v510
    %v512 = vpop.f32.mrf.mxu0
    %v513 = vpop.f32.mrf.mxu0
    %v514 = vadd.f32 0.0, %v513
    %v515 = vpop.f32.mrf.mxu0
    %516 = vmatprep.mubr.bf16.mxu0 0
    %517 = vmatmul.mubr.bf16.gmra.mxu0 %v441
    %v518 = vpop.f32.mrf.mxu0
    %v519 = vadd.f32 0.0, %v518
    %v520 = vpop.f32.mrf.mxu0
    %v521 = vpop.f32.mrf.mxu0
    %v522 = vadd.f32 0.0, %v521
    %v523 = vpop.f32.mrf.mxu0
    %524 = vmatprep.mubr.bf16.mxu0 0
    %525 = vmatmul.mubr.bf16.gmra.mxu0 %v444
    %v526 = vpop.f32.mrf.mxu0
    %v527 = vadd.f32 0.0, %v526
    %v528 = vpop.f32.mrf.mxu0
    %v529 = vpop.f32.mrf.mxu0
    %v530 = vadd.f32 0.0, %v529
    %v531 = vpop.f32.mrf.mxu0
    %532 = vmatprep.mubr.bf16.mxu0 0
    %533 = vmatmul.mubr.bf16.gmra.mxu0 %v447
    %v534 = vpop.f32.mrf.mxu0
    %v535 = vadd.f32 0.0, %v534
    %v536 = vpop.f32.mrf.mxu0
    %v537 = vpop.f32.mrf.mxu0
    %v538 = vadd.f32 0.0, %v537
    %v539 = vpop.f32.mrf.mxu0
    %540 = vmatprep.mubr.bf16.mxu0 0
    %541 = vmatmul.mubr.bf16.gmra.mxu0 %v450
    %v542 = vpop.f32.mrf.mxu0
    %v543 = vadd.f32 0.0, %v542
    %v544 = vpop.f32.mrf.mxu0
    %v545 = vpop.f32.mrf.mxu0
    %v546 = vadd.f32 0.0, %v545
    %v547 = vpop.f32.mrf.mxu0
    %548 = vdwg.mxu0
    %v549 = vpack.c.bf16 %v490, %v487
    %v550 = vpack.c.bf16 %v498, %v495
    %v551 = vpack.c.bf16 %v506, %v503
    %v552 = vpack.c.bf16 %v514, %v511
    %v553 = vpack.c.bf16 %v522, %v519
    %v554 = vpack.c.bf16 %v530, %v527
    %v555 = vpack.c.bf16 %v538, %v535
    %v556 = vpack.c.bf16 %v546, %v543
    %v558 = vpack.i.b16 %v411, %v411
    %v560 = vlaneseq
    %v561 = vshrl.u32 %v560, 7
    %v562 = vsub.s32 0, %v561
    %v563 = vrot.slane %v558, %v562
    %v564 = vadd.bf16 %v549, %v563
    %v565 = vadd.bf16 %v550, %v563
    %v566 = vadd.bf16 %v551, %v563
    %v567 = vadd.bf16 %v552, %v563
    %v568 = vadd.bf16 %v553, %v563
    %v569 = vadd.bf16 %v554, %v563
    %v570 = vadd.bf16 %v555, %v563
    %v571 = vadd.bf16 %v556, %v563
    %v572 = vtanh.bf16.pop %v564
    %v573 = vtanh.bf16.pop %v565
    %v574 = vtanh.bf16.pop %v566
    %v575 = vtanh.bf16.pop %v567
    %v576 = vtanh.bf16.pop %v568
    %v577 = vtanh.bf16.pop %v569
    %v578 = vtanh.bf16.pop %v570
    %v579 = vtanh.bf16.pop %v571
    %v580 = vld [vmem:[%s4] sm:$0xf]
    %v582 = vsel %vm70, %v580, 0
    %v585 = vsel %vm70, %v572, 0
    %v588 = vsel %vm70, %v573, 0
    %v591 = vsel %vm70, %v574, 0
    %v594 = vsel %vm70, %v575, 0
    %v597 = vsel %vm70, %v576, 0
    %v600 = vsel %vm70, %v577, 0
    %v603 = vsel %vm70, %v578, 0
    %v606 = vsel %vm70, %v579, 0
    %608 = vmatprep.subr.bf16.mxu0 0
    %609 = vmatpush1.bf16.xpose.msra.mxu0 %v606
    %610 = vmatprep.subr.bf16.mxu0 0
    %611 = vmatpush1.bf16.xpose.msra.mxu0 %v603
    %612 = vmatprep.subr.bf16.mxu0 0
    %613 = vmatpush1.bf16.xpose.msra.mxu0 %v600
    %614 = vmatprep.subr.bf16.mxu0 0
    %615 = vmatpush1.bf16.xpose.msra.mxu0 %v597
    %616 = vmatprep.subr.bf16.mxu0 0
    %617 = vmatpush1.bf16.xpose.msra.mxu0 %v594
    %618 = vmatprep.subr.bf16.mxu0 0
    %619 = vmatpush1.bf16.xpose.msra.mxu0 %v591
    %620 = vmatprep.subr.bf16.mxu0 0
    %621 = vmatpush1.bf16.xpose.msra.mxu0 %v588
    %622 = vmatprep.subr.bf16.mxu0 0
    %623 = vmatpush1.bf16.xpose.msra.mxu0 %v585
    %624 = vmatprep.subr.bf16.mxu0 0
    %625 = vmatpush2.bf16.xpose.msra.mxu0 0
    %626 = vmatprep.subr.bf16.mxu0 0
    %627 = vmatpush2.bf16.xpose.msra.mxu0 0
    %628 = vmatprep.subr.bf16.mxu0 0
    %629 = vmatpush2.bf16.xpose.msra.mxu0 0
    %630 = vmatprep.subr.bf16.mxu0 0
    %631 = vmatpush2.bf16.xpose.msra.mxu0 0
    %632 = vmatprep.subr.bf16.mxu0 0
    %633 = vmatpush2.bf16.xpose.msra.mxu0 0
    %634 = vmatprep.subr.bf16.mxu0 0
    %635 = vmatpush2.bf16.xpose.msra.mxu0 0
    %636 = vmatprep.subr.bf16.mxu0 0
    %637 = vmatpush2.bf16.xpose.msra.mxu0 0
    %638 = vmatprep.subr.bf16.mxu0 0
    %639 = vmatpush2.bf16.xpose.msra.mxu0 0
    %640 = vmatprep.mubr.bf16.mxu0 0
    %641 = vmatmul.mubr.bf16.gmra.mxu0 %v582
    %v642 = vpop.f32.mrf.mxu0
    %v643 = vadd.f32 0.0, %v642
    %v644 = vpop.f32.mrf.mxu0
    %v645 = vpop.f32.mrf.mxu0
    %v646 = vpop.f32.mrf.mxu0
    %647 = vdwg.mxu0
    %v648 = vld [vmem:[%s6] sm:$0x3]
    %650 = vset.pattern.permute.xlu0 0
    %651 = vperm.xlu0 %650, %v648
    %v652 = vpop.permute.xlu0 %651
    %v654 = vadd.f32 %v643, %v652
    %vm655 = vweird.f32 %v654
    %vm656 = vmxor %vm655, 1
    %v657 = vsel %vm656, %v654, 0.0
    %658 = vst [vmem:[#allocation2] sm:$0x3] %v657
    // Predicated region
    $region30: #{tpu_custom_call.1} parent=1 // pred_check
      _
    $region31: #{tpu_custom_call.1} parent=1 // pred_check_branch
      %660 = sbr.rel (0) target = $region33
    $region32: #{tpu_custom_call.1} parent=1 // pred_region
      %s662 = ssub.s32 32, 32
      %663 = vsyncadd [#allocation3], %s662
      %s665 = sshll.u32 [#allocation2], 4
      %s666 = int_to_ptr.vmem [resolvable:$true] %s665
      %668 = dma.vmem_to_hbm [thread:$0]  %s666, 32, %s7, [#allocation3]
    $region33: #{tpu_custom_call.1} parent=1 // pred_fallthru
      _
    // Predicated region
    $region34: #{tpu_custom_call.1} parent=1 // pred_check
      _
    $region35: #{tpu_custom_call.1} parent=1 // pred_check_branch
      %670 = sbr.rel (0) target = $region37
    $region36: #{tpu_custom_call.1} parent=1 // pred_region
      %671 = dma.done [#allocation3], 32
    $region37: #{tpu_custom_call.1} parent=1 // pred_fallthru
      _
    %672 = vsyncpa [#allocation3], 1

</llo_original>
